<compile_context>
chip_gen: v7x
topology: tpu7x:2x2x1
jax: 0.10.0
libtpu: 0.0.40
codegen_flags: <defaults>
</compile_context>

<pallas_src>
import functools

import jax
import jax.numpy as jnp
from jax import lax
from jax.experimental import pallas as pl
from jax.experimental.pallas import tpu as pltpu


def _round_up(x, m):
    return (x + m - 1) // m * m


def _pick_tile_h(h):
    # 8 rows per tile keeps (input + im2col patch + output) tiles small even on
    # v7x's 64 MiB VMEM; fall back to smaller divisors for odd heights.
    for t in (8, 4, 2, 1):
        if h % t == 0:
            return t
    return 1


def conv_stats_kernel(x_ref, top_ref, bot_ref, w_ref, y_ref, stats_ref):
    """Fused 3-branch conv (as one 3x3) + per-tile BN partial sums.

    x_ref   : (1, TH, W, Cin)   main input tile
    top_ref : (1, 1,  W, Cin)   row above the tile (clamped index; masked here)
    bot_ref : (1, 1,  W, Cin)   row below the tile (clamped index; masked here)
    w_ref   : (9*Cin, Cout_p)   re-parameterized weight as an im2col matrix
    y_ref   : (1, TH, W, Cout_p) pre-BN conv output (lane-dense)
    stats_ref: (1, 1, 2, Cout_p) per-tile [sum, sum_of_squares] per channel
    """
    _, TH, W, Cin = x_ref.shape
    Cp = y_ref.shape[-1]

    h = pl.program_id(1)
    nh = pl.num_programs(1)

    # Halo rows arrive via clamped index_maps; zero them at the true image
    # border (first / last H-tile).
    top_mask = (h > 0).astype(jnp.float32)
    bot_mask = (h < nh - 1).astype(jnp.float32)
    top = top_ref[...].reshape(1, W, Cin) * top_mask
    bot = bot_ref[...].reshape(1, W, Cin) * bot_mask
    body = x_ref[...].reshape(TH, W, Cin)

    # Assemble the (TH+2, W+2, Cin) window with a zero border along W.
    xcol = jnp.concatenate([top, body, bot], axis=0)          # (TH+2, W, Cin)
    zcol = jnp.zeros((TH + 2, 1, Cin), jnp.float32)
    xwin = jnp.concatenate([zcol, xcol, zcol], axis=1)        # (TH+2, W+2, Cin)

    # im2col: one (TH*W, 9*Cin) patch, one MXU matmul (K = 9*Cin).
    taps = [xwin[kh:kh + TH, kw:kw + W, :]
            for kh in range(3) for kw in range(3)]
    patch = jnp.concatenate(taps, axis=-1).reshape(TH * W, 9 * Cin)
    acc = jnp.dot(patch, w_ref[...], preferred_element_type=jnp.float32)

    y_ref[...] = acc.reshape(1, TH, W, Cp)

    # Single-pass BN partials: per-channel sum and sum of squares.
    s = jnp.sum(acc, axis=0, keepdims=True)                   # (1, Cp)
    ss = jnp.sum(acc * acc, axis=0, keepdims=True)            # (1, Cp)
    stats_ref[0:1, 0:1, 0:1, :] = s.reshape(1, 1, 1, Cp)
    stats_ref[0:1, 0:1, 1:2, :] = ss.reshape(1, 1, 1, Cp)


def bn_relu_kernel(y_ref, scale_ref, shift_ref, o_ref):
    """Apply per-channel affine (folded BN) + ReLU, lane-dense."""
    cp = y_ref.shape[-1]
    scale = scale_ref[...].reshape(1, 1, 1, cp)
    shift = shift_ref[...].reshape(1, 1, 1, cp)
    o_ref[...] = jnp.maximum(y_ref[...] * scale + shift, 0.0)


def acnet_forward(x_nchw, w3x3, w1x3, w3x1, gamma, beta, eps=1e-5):
    """x_nchw: (N, Cin, H, W); conv weights in PyTorch OIHW layout; returns NCHW."""
    N, Cin, H, W = x_nchw.shape
    Cout = w3x3.shape[0]
    Cout_p = _round_up(Cout, 128)

    # ACNet re-parameterization: fold the 1x3 / 3x1 branches into one 3x3
    # kernel (exact for stride=1, dilation=1; all branch outputs have identical
    # shapes, so the F.pad / slicing fixups in the PyTorch forward are no-ops).
    w = w3x3
    w = w.at[:, :, 1:2, :].add(w1x3)   # 1x3 branch -> middle row
    w = w.at[:, :, :, 1:2].add(w3x1)   # 3x1 branch -> middle column
    # OIHW -> HWIO -> im2col matrix (9*Cin, Cout), padded to a lane multiple.
    w_mat = jnp.transpose(w, (2, 3, 1, 0)).reshape(9 * Cin, Cout)
    w_mat = jnp.pad(w_mat.astype(jnp.float32), ((0, 0), (0, Cout_p - Cout)))

    x = jnp.transpose(x_nchw, (0, 2, 3, 1)).astype(jnp.float32)  # NHWC

    TH = _pick_tile_h(H)
    nH = H // TH

    # ---- Pass 1: conv (single im2col matmul per tile) + BN partial sums ----
    y, stats = pl.pallas_call(
        conv_stats_kernel,
        out_shape=(
            jax.ShapeDtypeStruct((N, H, W, Cout_p), jnp.float32),
            jax.ShapeDtypeStruct((N, nH, 2, Cout_p), jnp.float32),
        ),
        grid=(N, nH),
        in_specs=[
            pl.BlockSpec((1, TH, W, Cin), lambda n, h: (n, h, 0, 0)),
            # Halo rows: block size 1 along H => block index == row index.
            pl.BlockSpec((1, 1, W, Cin),
                         lambda n, h: (n, jnp.maximum(h * TH - 1, 0), 0, 0)),
            pl.BlockSpec((1, 1, W, Cin),
                         lambda n, h: (n, jnp.minimum(h * TH + TH, H - 1), 0, 0)),
            pl.BlockSpec((9 * Cin, Cout_p), lambda n, h: (0, 0)),
        ],
        out_specs=(
            pl.BlockSpec((1, TH, W, Cout_p), lambda n, h: (n, h, 0, 0)),
            pl.BlockSpec((1, 1, 2, Cout_p), lambda n, h: (n, h, 0, 0)),
        ),
        compiler_params=pltpu.CompilerParams(
            dimension_semantics=("parallel", "parallel"),
            vmem_limit_bytes=32 * 1024 * 1024),
    )(x, x, x, w_mat)

    # ---- Global BN statistics (training mode: biased variance over N,H,W) ----
    sums = jnp.sum(stats, axis=(0, 1))                 # (2, Cout_p)
    count = jnp.float32(N * H * W)
    mean = sums[0] / count
    var = jnp.maximum(sums[1] / count - mean * mean, 0.0)
    inv = lax.rsqrt(var + eps)
    gamma_p = jnp.pad(gamma.astype(jnp.float32), (0, Cout_p - Cout))
    beta_p = jnp.pad(beta.astype(jnp.float32), (0, Cout_p - Cout))
    scale = (gamma_p * inv).reshape(1, Cout_p)
    shift = (beta_p - mean * gamma_p * inv).reshape(1, Cout_p)

    # ---- Pass 2: BN apply + ReLU (lane-dense elementwise) ----
    out_p = pl.pallas_call(
        bn_relu_kernel,
        out_shape=jax.ShapeDtypeStruct((N, H, W, Cout_p), jnp.float32),
        grid=(N, nH),
        in_specs=[
            pl.BlockSpec((1, TH, W, Cout_p), lambda n, h: (n, h, 0, 0)),
            pl.BlockSpec((1, Cout_p), lambda n, h: (0, 0)),
            pl.BlockSpec((1, Cout_p), lambda n, h: (0, 0)),
        ],
        out_specs=pl.BlockSpec((1, TH, W, Cout_p), lambda n, h: (n, h, 0, 0)),
        compiler_params=pltpu.CompilerParams(
            dimension_semantics=("parallel", "parallel"),
            vmem_limit_bytes=32 * 1024 * 1024),
    )(y, scale, shift)

    out = out_p[..., :Cout]
    return jnp.transpose(out, (0, 3, 1, 2))


def acnet_reference(x, w3x3, w1x3, w3x1, gamma, beta, eps=1e-5):
    """Pure-JAX reference mirroring the PyTorch forward (NCHW)."""
    dn = ("NCHW", "OIHW", "NCHW")
    y = lax.conv_general_dilated(x, w3x3, (1, 1), ((1, 1), (1, 1)),
                                 dimension_numbers=dn)
    y = y + lax.conv_general_dilated(x, w1x3, (1, 1), ((0, 0), (1, 1)),
                                     dimension_numbers=dn)
    y = y + lax.conv_general_dilated(x, w3x1, (1, 1), ((1, 1), (0, 0)),
                                     dimension_numbers=dn)
    mean = jnp.mean(y, axis=(0, 2, 3), keepdims=True)
    var = jnp.mean((y - mean) ** 2, axis=(0, 2, 3), keepdims=True)
    yn = (y - mean) * lax.rsqrt(var + eps) * gamma.reshape(1, -1, 1, 1) \
         + beta.reshape(1, -1, 1, 1)
    return jnp.maximum(yn, 0.0)


if __name__ == "__main__":
    key = jax.random.PRNGKey(0)
    k_x, k_w33, k_w13, k_w31 = jax.random.split(key, 4)

    N, Cin, Cout, H, W = 2, 4, 8, 16, 16

    x = jax.random.normal(k_x, (N, Cin, H, W), dtype=jnp.float32)
    # Deterministic synthetic weights (PyTorch OIHW layout); BN affine params
    # use the PyTorch defaults gamma=1, beta=0.
    w3x3 = 0.1 * jax.random.normal(k_w33, (Cout, Cin, 3, 3), dtype=jnp.float32)
    w1x3 = 0.1 * jax.random.normal(k_w13, (Cout, Cin, 1, 3), dtype=jnp.float32)
    w3x1 = 0.1 * jax.random.normal(k_w31, (Cout, Cin, 3, 1), dtype=jnp.float32)
    gamma = jnp.ones((Cout,), jnp.float32)
    beta = jnp.zeros((Cout,), jnp.float32)

    out = acnet_forward(x, w3x3, w1x3, w3x1, gamma, beta)
    out = jax.block_until_ready(out)

    ref = acnet_reference(x, w3x3, w1x3, w3x1, gamma, beta)
    if not bool(jnp.allclose(out, ref, atol=1e-4, rtol=1e-4)):
        raise AssertionError("Pallas ACNet output mismatch vs JAX reference")

    print("KERNEL_OK")
</pallas_src>

<mosaic_0001>
module attributes {stable_mosaic.version = 11 : i64} {
  func.func @conv_stats_kernel(%arg0: i32, %arg1: i32, %arg2: memref<1x8x16x4xf32, #tpu.memory_space<vmem>>, %arg3: memref<1x1x16x4xf32, #tpu.memory_space<vmem>>, %arg4: memref<1x1x16x4xf32, #tpu.memory_space<vmem>>, %arg5: memref<36x128xf32, #tpu.memory_space<vmem>>, %arg6: memref<1x8x16x128xf32, #tpu.memory_space<vmem>>, %arg7: memref<1x1x2x128xf32, #tpu.memory_space<vmem>>) attributes {dimension_semantics = [#tpu.dimension_semantics<parallel>, #tpu.dimension_semantics<parallel>], iteration_bounds = array<i64: 2, 2>, scalar_prefetch = 0 : i64, scratch_operands = 0 : i64, tpu.core_type = #tpu.core_type<tc>, window_params = [{transform_indices = @transform_0, window_bounds = array<i64: 1, 8, 16, 4>}, {transform_indices = @transform_1, window_bounds = array<i64: 1, 1, 16, 4>}, {transform_indices = @transform_2, window_bounds = array<i64: 1, 1, 16, 4>}, {pipeline_mode = #tpu.pipeline_mode<synchronous>, transform_indices = @transform_3, window_bounds = array<i64: 36, 128>}, {transform_indices = @transform_4, window_bounds = array<i64: 1, 8, 16, 128>}, {transform_indices = @transform_5, window_bounds = array<i64: 1, 1, 2, 128>}]} {
    %c0_i32 = arith.constant 0 : i32
    %0 = arith.cmpi sgt, %arg1, %c0_i32 : i32
    %1 = arith.extui %0 : i1 to i32
    %2 = arith.sitofp %1 : i32 to f32
    %c1_i32 = arith.constant 1 : i32
    %3 = arith.cmpi slt, %arg1, %c1_i32 : i32
    %4 = arith.extui %3 : i1 to i32
    %5 = arith.sitofp %4 : i32 to f32
    %c0 = arith.constant 0 : index
    %c0_0 = arith.constant 0 : index
    %c0_1 = arith.constant 0 : index
    %c0_2 = arith.constant 0 : index
    %6 = vector.load %arg3[%c0, %c0_0, %c0_1, %c0_2] : memref<1x1x16x4xf32, #tpu.memory_space<vmem>>, vector<1x1x16x4xf32>
    %7 = vector.shape_cast %6 : vector<1x1x16x4xf32> to vector<1x16x4xf32>
    %8 = vector.broadcast %2 : f32 to vector<1x16x4xf32>
    %9 = arith.mulf %7, %8 : vector<1x16x4xf32>
    %c0_3 = arith.constant 0 : index
    %c0_4 = arith.constant 0 : index
    %c0_5 = arith.constant 0 : index
    %c0_6 = arith.constant 0 : index
    %10 = vector.load %arg4[%c0_3, %c0_4, %c0_5, %c0_6] : memref<1x1x16x4xf32, #tpu.memory_space<vmem>>, vector<1x1x16x4xf32>
    %11 = vector.shape_cast %10 : vector<1x1x16x4xf32> to vector<1x16x4xf32>
    %12 = vector.broadcast %5 : f32 to vector<1x16x4xf32>
    %13 = arith.mulf %11, %12 : vector<1x16x4xf32>
    %c0_7 = arith.constant 0 : index
    %c0_8 = arith.constant 0 : index
    %c0_9 = arith.constant 0 : index
    %c0_10 = arith.constant 0 : index
    %14 = vector.load %arg2[%c0_7, %c0_8, %c0_9, %c0_10] : memref<1x8x16x4xf32, #tpu.memory_space<vmem>>, vector<1x8x16x4xf32>
    %15 = vector.shape_cast %14 : vector<1x8x16x4xf32> to vector<8x16x4xf32>
    %16 = tpu.concatenate %9, %15, %13 in 0 : vector<1x16x4xf32>, vector<8x16x4xf32>, vector<1x16x4xf32> -> vector<10x16x4xf32>
    %cst = arith.constant 0.000000e+00 : f32
    %17 = vector.broadcast %cst : f32 to vector<10x1x4xf32>
    %18 = tpu.concatenate %17, %16, %17 in 1 : vector<10x1x4xf32>, vector<10x16x4xf32>, vector<10x1x4xf32> -> vector<10x18x4xf32>
    %19 = vector.extract_strided_slice %18 {offsets = [0, 0, 0], sizes = [8, 16, 4], strides = [1, 1, 1]} : vector<10x18x4xf32> to vector<8x16x4xf32>
    %20 = vector.extract_strided_slice %18 {offsets = [0, 1, 0], sizes = [8, 16, 4], strides = [1, 1, 1]} : vector<10x18x4xf32> to vector<8x16x4xf32>
    %21 = vector.extract_strided_slice %18 {offsets = [0, 2, 0], sizes = [8, 16, 4], strides = [1, 1, 1]} : vector<10x18x4xf32> to vector<8x16x4xf32>
    %22 = vector.extract_strided_slice %18 {offsets = [1, 0, 0], sizes = [8, 16, 4], strides = [1, 1, 1]} : vector<10x18x4xf32> to vector<8x16x4xf32>
    %23 = vector.extract_strided_slice %18 {offsets = [1, 1, 0], sizes = [8, 16, 4], strides = [1, 1, 1]} : vector<10x18x4xf32> to vector<8x16x4xf32>
    %24 = vector.extract_strided_slice %18 {offsets = [1, 2, 0], sizes = [8, 16, 4], strides = [1, 1, 1]} : vector<10x18x4xf32> to vector<8x16x4xf32>
    %25 = vector.extract_strided_slice %18 {offsets = [2, 0, 0], sizes = [8, 16, 4], strides = [1, 1, 1]} : vector<10x18x4xf32> to vector<8x16x4xf32>
    %26 = vector.extract_strided_slice %18 {offsets = [2, 1, 0], sizes = [8, 16, 4], strides = [1, 1, 1]} : vector<10x18x4xf32> to vector<8x16x4xf32>
    %27 = vector.extract_strided_slice %18 {offsets = [2, 2, 0], sizes = [8, 16, 4], strides = [1, 1, 1]} : vector<10x18x4xf32> to vector<8x16x4xf32>
    %28 = tpu.concatenate %19, %20, %21, %22, %23, %24, %25, %26, %27 in 2 : vector<8x16x4xf32>, vector<8x16x4xf32>, vector<8x16x4xf32>, vector<8x16x4xf32>, vector<8x16x4xf32>, vector<8x16x4xf32>, vector<8x16x4xf32>, vector<8x16x4xf32>, vector<8x16x4xf32> -> vector<8x16x36xf32>
    %29 = vector.shape_cast %28 : vector<8x16x36xf32> to vector<128x36xf32>
    %c0_11 = arith.constant 0 : index
    %c0_12 = arith.constant 0 : index
    %30 = vector.load %arg5[%c0_11, %c0_12] : memref<36x128xf32, #tpu.memory_space<vmem>>, vector<36x128xf32>
    %cst_13 = arith.constant dense<0.000000e+00> : vector<128x128xf32>
    %31 = tpu.matmul %29, %30, %cst_13 {dimension_numbers = #tpu.dot_dimension_numbers<[1], [0], [0], [1], [0, 0, 1, 1], [], []>} : vector<128x36xf32>, vector<36x128xf32>, vector<128x128xf32> -> vector<128x128xf32>
    %32 = vector.shape_cast %31 : vector<128x128xf32> to vector<1x8x16x128xf32>
    %c0_14 = arith.constant 0 : index
    %c0_15 = arith.constant 0 : index
    %c0_16 = arith.constant 0 : index
    %c0_17 = arith.constant 0 : index
    %33 = vector.load %arg6[%c0_14, %c0_15, %c0_16, %c0_17] : memref<1x8x16x128xf32, #tpu.memory_space<vmem>>, vector<1x8x16x128xf32>
    tpu.vector_store %arg6[%c0_14, %c0_15, %c0_16, %c0_17], %32 {strides = array<i32>} : memref<1x8x16x128xf32, #tpu.memory_space<vmem>>, vector<1x8x16x128xf32>,
    %cst_18 = arith.constant dense<0.000000e+00> : vector<128xf32>
    %34 = vector.multi_reduction <add>, %31, %cst_18 [0] : vector<128x128xf32> to vector<128xf32>
    %35 = vector.shape_cast %34 : vector<128xf32> to vector<1x128xf32>
    %36 = arith.mulf %31, %31 : vector<128x128xf32>
    %cst_19 = arith.constant dense<0.000000e+00> : vector<128xf32>
    %37 = vector.multi_reduction <add>, %36, %cst_19 [0] : vector<128x128xf32> to vector<128xf32>
    %38 = vector.shape_cast %37 : vector<128xf32> to vector<1x128xf32>
    %39 = vector.shape_cast %35 : vector<1x128xf32> to vector<1x1x1x128xf32>
    %c0_20 = arith.constant 0 : index
    %c0_21 = arith.constant 0 : index
    %c0_22 = arith.constant 0 : index
    %c0_23 = arith.constant 0 : index
    %40 = vector.load %arg7[%c0_20, %c0_21, %c0_22, %c0_23] : memref<1x1x2x128xf32, #tpu.memory_space<vmem>>, vector<1x1x1x128xf32>
    tpu.vector_store %arg7[%c0_20, %c0_21, %c0_22, %c0_23], %39 {strides = array<i32>} : memref<1x1x2x128xf32, #tpu.memory_space<vmem>>, vector<1x1x1x128xf32>,
    %41 = vector.shape_cast %38 : vector<1x128xf32> to vector<1x1x1x128xf32>
    %c0_24 = arith.constant 0 : index
    %c0_25 = arith.constant 0 : index
    %c1 = arith.constant 1 : index
    %c0_26 = arith.constant 0 : index
    %42 = vector.load %arg7[%c0_24, %c0_25, %c1, %c0_26] : memref<1x1x2x128xf32, #tpu.memory_space<vmem>>, vector<1x1x1x128xf32>
    tpu.vector_store %arg7[%c0_24, %c0_25, %c1, %c0_26], %41 {strides = array<i32>} : memref<1x1x2x128xf32, #tpu.memory_space<vmem>>, vector<1x1x1x128xf32>,
    return
  }
  func.func @transform_0(%arg0: i32, %arg1: i32) -> (i32, i32, i32, i32) {
    %c0_i32 = arith.constant 0 : i32
    %c0_i32_0 = arith.constant 0 : i32
    %c0_i32_1 = arith.constant 0 : i32
    return %arg0, %arg1, %c0_i32, %c0_i32_0 : i32, i32, i32, i32
  }
  func.func @transform_1(%arg0: i32, %arg1: i32) -> (i32, i32, i32, i32) {
    %c8_i32 = arith.constant 8 : i32
    %0 = arith.muli %arg1, %c8_i32 : i32
    %c1_i32 = arith.constant 1 : i32
    %1 = arith.subi %0, %c1_i32 : i32
    %c0_i32 = arith.constant 0 : i32
    %2 = arith.maxsi %1, %c0_i32 : i32
    %c0_i32_0 = arith.constant 0 : i32
    %c0_i32_1 = arith.constant 0 : i32
    %c0_i32_2 = arith.constant 0 : i32
    return %arg0, %2, %c0_i32_0, %c0_i32_1 : i32, i32, i32, i32
  }
  func.func @transform_2(%arg0: i32, %arg1: i32) -> (i32, i32, i32, i32) {
    %c8_i32 = arith.constant 8 : i32
    %0 = arith.muli %arg1, %c8_i32 : i32
    %c8_i32_0 = arith.constant 8 : i32
    %1 = arith.addi %0, %c8_i32_0 : i32
    %c15_i32 = arith.constant 15 : i32
    %2 = arith.minsi %1, %c15_i32 : i32
    %c0_i32 = arith.constant 0 : i32
    %c0_i32_1 = arith.constant 0 : i32
    %c0_i32_2 = arith.constant 0 : i32
    return %arg0, %2, %c0_i32, %c0_i32_1 : i32, i32, i32, i32
  }
  func.func @transform_3(%arg0: i32, %arg1: i32) -> (i32, i32) {
    %c0_i32 = arith.constant 0 : i32
    %c0_i32_0 = arith.constant 0 : i32
    %c0_i32_1 = arith.constant 0 : i32
    return %c0_i32, %c0_i32_0 : i32, i32
  }
  func.func @transform_4(%arg0: i32, %arg1: i32) -> (i32, i32, i32, i32) {
    %c0_i32 = arith.constant 0 : i32
    %c0_i32_0 = arith.constant 0 : i32
    %c0_i32_1 = arith.constant 0 : i32
    return %arg0, %arg1, %c0_i32, %c0_i32_0 : i32, i32, i32, i32
  }
  func.func @transform_5(%arg0: i32, %arg1: i32) -> (i32, i32, i32, i32) {
    %c0_i32 = arith.constant 0 : i32
    %c0_i32_0 = arith.constant 0 : i32
    %c0_i32_1 = arith.constant 0 : i32
    return %arg0, %arg1, %c0_i32, %c0_i32_0 : i32, i32, i32, i32
  }
}

</mosaic_0001>

<llo_original>
// kernel: tpu_custom_call.1
$region0: #{tpu_custom_call.1}
  #allocation0 [shape = 'u32[]', space=smem, size = 0x4, offset = 0x4, fixed_abs, tag = 'smem constant byte address 0x4 - core index']
  #allocation1 [shape = 'u32[144,128]{1,0:T(1,128)}', space=vmem, size = 0x12000, scoped, tag = 'internal scratch']
  %s0 = inlined_call_operand.vmem [shape: f32[2,16,16,4], index: 0, kind: input, shape index: {}]
  %s1 = inlined_call_operand.vmem [shape: f32[2,16,16,4], index: 1, kind: input, shape index: {}]
  %s2 = inlined_call_operand.vmem [shape: f32[2,16,16,4], index: 2, kind: input, shape index: {}]
  %s3 = inlined_call_operand.vmem [shape: f32[36,128], index: 3, kind: input, shape index: {}]
  %s4 = inlined_call_operand.hbm [shape: f32[2,16,16,128], index: 4, kind: output, shape index: {0}]
  %s5 = inlined_call_operand.hbm [shape: f32[2,2,2,128], index: 5, kind: output, shape index: {1}]
  %6 = xla_tuple %s4, %s5
  %s7 = sld [smem:[#allocation0]]
  $region57: #{tpu_custom_call.1} parent=0
    _
  %s9 = ssub.s32 1, %s7
  %s10 = scalar_select 0, %s9, %s7
  $region1: #{tpu_custom_call.1} parent=0
    #allocation2 [shape = 'u8[131072]{0}', space=vmem, size = 0x20000, scoped, tag = 'output window, operand 0']
    #allocation3 [shape = 's32[2]{0}', space=sflag, size = 0x8, scoped, tag = 'scoped memory for tpu_custom_call.1']
    #allocation4 [shape = 'u8[2048]{0}', space=vmem, size = 0x800, scoped, tag = 'output window, operand 1']
    #allocation5 [shape = 's32[2]{0}', space=sflag, size = 0x8, scoped, tag = 'scoped memory for tpu_custom_call.1']
    %11 = vsyncpa [#allocation3], 0
    %s12 = scalar_lea.sflag [#allocation3], 1
    %13 = vsyncpa %s12, 0
    %14 = vsyncpa [#allocation5], 0
    %s15 = scalar_lea.sflag [#allocation5], 1
    %16 = vsyncpa %s15, 0
    loop: start=0, step=1, limit=6
    $region2: #{tpu_custom_call.1} parent=1 // loop_pre_header
      _
    $region3: #{tpu_custom_call.1} parent=1 // loop_header
      %s18 = sphi 0, %s22
      %p19 = scmp.ge.s32.totalorder %s18, 6
      %s25 = sphi 0, %s37
      %s26 = sphi 0, %s33
      %s27 = sphi 0, %s25
      %s28 = sphi 0, %s26
      %s29 = sphi 0, %s27
      %s30 = sphi 0, %s28
      %s42 = sphi 0, %s44
      %s45 = sphi 0, %s42
      %s46 = sphi 0, %s45
      %s62 = sphi 0, %s46
      %s78 = sphi 0, %s80
      %s81 = sphi 0, %s78
      %s82 = sphi 0, %s81
      %s98 = sphi 0, %s82
      %s114 = sphi 0, %s116
      %s117 = sphi 0, %s114
      %s118 = sphi 0, %s117
      %s134 = sphi 0, %s118
      %s138 = sphi 0, %s138
      %s140 = sphi 0, %s138
      %s141 = sphi 0, %s140
      %s155 = sphi 0, %s141
      %s163 = sphi 0, %s165
      %s166 = sphi 0, %s163
      %s167 = sphi 0, %s166
      %s183 = sphi 0, %s167
      %s191 = sphi 0, %s193
      %s194 = sphi 0, %s191
      %s195 = sphi 0, %s194
      %s211 = sphi 0, %s195
    $region4: #{tpu_custom_call.1} parent=1 // loop_header_branch
      %21 = sbr.rel (%p19) target = $region8
    $region5: #{tpu_custom_call.1} parent=1 // loop_body
      %s23 = ssub.s32 %s18, 1
      %s24 = ssub.s32 %s18, 2
      %s31 = sadd.s32 1, %s26
      %p32 = scmp.ge.s32.totalorder %s31, 2
      %s33 = scalar_select %p32, 0, %s31
      %s34 = sadd.s32 1, %s25
      %s35 = scalar_select %p32, %s34, %s25
      %p36 = scmp.ge.s32.totalorder %s35, 2
      %s37 = scalar_select %p36, 0, %s35
      %s38 = ssub.s32 %s25, %s37
      %s39 = ssub.s32 %s26, %s33
      %s40 = sor.u32 %s38, %s39
      %p41 = scmp.eq.s32.totalorder %s40, 0
      %s43 = sadd.s32 %s42, 1
      %s44 = scalar_select %p41, %s42, %s43
      %p47 = pneg %p41
      %p48 = scmp.eq.s32.totalorder %s18, 3
      %p49 = por %p47, %p48
      %p50 = scmp.ne.s32.totalorder %s42, %s45
      %p51 = scmp.eq.s32.totalorder %s18, 0
      %p52 = por %p50, %p51
      %p53 = scmp.ne.s32.totalorder %s42, %s45
      %p54 = scmp.eq.s32.totalorder %s23, 3
      %p55 = por %p53, %p54
      %p56 = scmp.ne.s32.totalorder %s45, %s46
      %p57 = scmp.eq.s32.totalorder %s23, 0
      %p58 = por %p56, %p57
      %p59 = scmp.ne.s32.totalorder %s45, %s46
      %p60 = scmp.eq.s32.totalorder %s24, 3
      %p61 = por %p59, %p60
      %p63 = scmp.ne.s32.totalorder %s46, %s62
      %p64 = scmp.eq.s32.totalorder %s24, 0
      %p65 = por %p63, %p64
      %s66 = smul.u32 %s26, 8
      %s67 = ssub.s32 %s66, 1
      %p68 = scmp.gt.s32.totalorder %s67, 0
      %s69 = scalar_select %p68, %s67, 0
      %s70 = smul.u32 %s33, 8
      %s71 = ssub.s32 %s70, 1
      %p72 = scmp.gt.s32.totalorder %s71, 0
      %s73 = scalar_select %p72, %s71, 0
      %s74 = ssub.s32 %s25, %s37
      %s75 = ssub.s32 %s69, %s73
      %s76 = sor.u32 %s74, %s75
      %p77 = scmp.eq.s32.totalorder %s76, 0
      %s79 = sadd.s32 %s78, 1
      %s80 = scalar_select %p77, %s78, %s79
      %p83 = pneg %p77
      %p84 = scmp.eq.s32.totalorder %s18, 3
      %p85 = por %p83, %p84
      %p86 = scmp.ne.s32.totalorder %s78, %s81
      %p87 = scmp.eq.s32.totalorder %s18, 0
      %p88 = por %p86, %p87
      %p89 = scmp.ne.s32.totalorder %s78, %s81
      %p90 = scmp.eq.s32.totalorder %s23, 3
      %p91 = por %p89, %p90
      %p92 = scmp.ne.s32.totalorder %s81, %s82
      %p93 = scmp.eq.s32.totalorder %s23, 0
      %p94 = por %p92, %p93
      %p95 = scmp.ne.s32.totalorder %s81, %s82
      %p96 = scmp.eq.s32.totalorder %s24, 3
      %p97 = por %p95, %p96
      %p99 = scmp.ne.s32.totalorder %s82, %s98
      %p100 = scmp.eq.s32.totalorder %s24, 0
      %p101 = por %p99, %p100
      %s102 = smul.u32 %s26, 8
      %s103 = sadd.s32 %s102, 8
      %p104 = scmp.lt.s32.totalorder %s103, 15
      %s105 = scalar_select %p104, %s103, 15
      %s106 = smul.u32 %s33, 8
      %s107 = sadd.s32 %s106, 8
      %p108 = scmp.lt.s32.totalorder %s107, 15
      %s109 = scalar_select %p108, %s107, 15
      %s110 = ssub.s32 %s25, %s37
      %s111 = ssub.s32 %s105, %s109
      %s112 = sor.u32 %s110, %s111
      %p113 = scmp.eq.s32.totalorder %s112, 0
      %s115 = sadd.s32 %s114, 1
      %s116 = scalar_select %p113, %s114, %s115
      %p119 = pneg %p113
      %p120 = scmp.eq.s32.totalorder %s18, 3
      %p121 = por %p119, %p120
      %p122 = scmp.ne.s32.totalorder %s114, %s117
      %p123 = scmp.eq.s32.totalorder %s18, 0
      %p124 = por %p122, %p123
      %p125 = scmp.ne.s32.totalorder %s114, %s117
      %p126 = scmp.eq.s32.totalorder %s23, 3
      %p127 = por %p125, %p126
      %p128 = scmp.ne.s32.totalorder %s117, %s118
      %p129 = scmp.eq.s32.totalorder %s23, 0
      %p130 = por %p128, %p129
      %p131 = scmp.ne.s32.totalorder %s117, %s118
      %p132 = scmp.eq.s32.totalorder %s24, 3
      %p133 = por %p131, %p132
      %p135 = scmp.ne.s32.totalorder %s118, %s134
      %p136 = scmp.eq.s32.totalorder %s24, 0
      %p137 = por %p135, %p136
      %s139 = sadd.s32 %s138, 1
      %p142 = scmp.eq.s32.totalorder %s18, 3
      %p143 = scmp.ne.s32.totalorder %s138, %s140
      %p144 = scmp.eq.s32.totalorder %s18, 0
      %p145 = por %p143, %p144
      %p146 = scmp.ne.s32.totalorder %s138, %s140
      %p147 = scmp.eq.s32.totalorder %s23, 3
      %p148 = por %p146, %p147
      %p149 = scmp.ne.s32.totalorder %s140, %s141
      %p150 = scmp.eq.s32.totalorder %s23, 0
      %p151 = por %p149, %p150
      %p152 = scmp.ne.s32.totalorder %s140, %s141
      %p153 = scmp.eq.s32.totalorder %s24, 3
      %p154 = por %p152, %p153
      %p156 = scmp.ne.s32.totalorder %s141, %s155
      %p157 = scmp.eq.s32.totalorder %s24, 0
      %p158 = por %p156, %p157
      %s159 = ssub.s32 %s25, %s37
      %s160 = ssub.s32 %s26, %s33
      %s161 = sor.u32 %s159, %s160
      %p162 = scmp.eq.s32.totalorder %s161, 0
      %s164 = sadd.s32 %s163, 1
      %s165 = scalar_select %p162, %s163, %s164
      %p168 = pneg %p162
      %p169 = scmp.eq.s32.totalorder %s18, 3
      %p170 = por %p168, %p169
      %p171 = scmp.ne.s32.totalorder %s163, %s166
      %p172 = scmp.eq.s32.totalorder %s18, 0
      %p173 = por %p171, %p172
      %p174 = scmp.ne.s32.totalorder %s163, %s166
      %p175 = scmp.eq.s32.totalorder %s23, 3
      %p176 = por %p174, %p175
      %p177 = scmp.ne.s32.totalorder %s166, %s167
      %p178 = scmp.eq.s32.totalorder %s23, 0
      %p179 = por %p177, %p178
      %p180 = scmp.ne.s32.totalorder %s166, %s167
      %p181 = scmp.eq.s32.totalorder %s24, 3
      %p182 = por %p180, %p181
      %p184 = scmp.ne.s32.totalorder %s167, %s183
      %p185 = scmp.eq.s32.totalorder %s24, 0
      %p186 = por %p184, %p185
      %s187 = ssub.s32 %s25, %s37
      %s188 = ssub.s32 %s26, %s33
      %s189 = sor.u32 %s187, %s188
      %p190 = scmp.eq.s32.totalorder %s189, 0
      %s192 = sadd.s32 %s191, 1
      %s193 = scalar_select %p190, %s191, %s192
      %p196 = pneg %p190
      %p197 = scmp.eq.s32.totalorder %s18, 3
      %p198 = por %p196, %p197
      %p199 = scmp.ne.s32.totalorder %s191, %s194
      %p200 = scmp.eq.s32.totalorder %s18, 0
      %p201 = por %p199, %p200
      %p202 = scmp.ne.s32.totalorder %s191, %s194
      %p203 = scmp.eq.s32.totalorder %s23, 3
      %p204 = por %p202, %p203
      %p205 = scmp.ne.s32.totalorder %s194, %s195
      %p206 = scmp.eq.s32.totalorder %s23, 0
      %p207 = por %p205, %p206
      %p208 = scmp.ne.s32.totalorder %s194, %s195
      %p209 = scmp.eq.s32.totalorder %s24, 3
      %p210 = por %p208, %p209
      %p212 = scmp.ne.s32.totalorder %s195, %s211
      %p213 = scmp.eq.s32.totalorder %s24, 0
      %p214 = por %p212, %p213
      %p215 = scmp.le.s32.totalorder 1, %s18
      %p216 = scmp.lt.s32.totalorder %s18, 5
      %p217 = pnand %p215, %p216
      %p218 = pneg %p217
      // Predicated region
      $region9: #{tpu_custom_call.1} parent=5 // pred_check
        _
      $region10: #{tpu_custom_call.1} parent=5 // pred_check_branch
        %220 = sbr.rel (%p217) target = $region12
      $region11: #{tpu_custom_call.1} parent=5 // pred_region
        %s221 = ssub.s32 %s18, 1
        // Predicated region
        $region13: #{tpu_custom_call.1} parent=11 // pred_check
          %p222 = pneg %p151
        $region14: #{tpu_custom_call.1} parent=11 // pred_check_branch
          %224 = sbr.rel (%p222) target = $region16
        $region15: #{tpu_custom_call.1} parent=11 // pred_region
          _
        $region16: #{tpu_custom_call.1} parent=11 // pred_fallthru
          _
      $region12: #{tpu_custom_call.1} parent=5 // pred_fallthru
        _
      %p225 = scmp.lt.s32.totalorder %s18, 4
      // Predicated region
      $region17: #{tpu_custom_call.1} parent=5 // pred_check
        %p226 = pneg %p225
      $region18: #{tpu_custom_call.1} parent=5 // pred_check_branch
        %228 = sbr.rel (%p226) target = $region20
      $region19: #{tpu_custom_call.1} parent=5 // pred_region
        // Predicated region
        $region21: #{tpu_custom_call.1} parent=19 // pred_check
          %p229 = pneg %p52
        $region22: #{tpu_custom_call.1} parent=19 // pred_check_branch
          %231 = sbr.rel (%p229) target = $region24
        $region23: #{tpu_custom_call.1} parent=19 // pred_region
          %s232 = smul.u32 8, %s26
          %p233 = scmp.lt.s32.totalorder %s25, 1
          %s234 = scalar_select %p233, %s25, 1
          %p235 = scmp.lt.s32.totalorder %s232, 15
          %s236 = scalar_select %p235, %s232, 15
          %s237 = smul.addr %s236, 2
          %s238 = smul.addr %s234, 32
          %s239 = sadd.s32 %s237, %s238
          %s240 = smul.addr %s239, 8
          %s241 = scalar_lea.vmem %s0, %s240
          %s242 = smul.u32 8, %s26
        $region24: #{tpu_custom_call.1} parent=19 // pred_fallthru
          _
        // Predicated region
        $region25: #{tpu_custom_call.1} parent=19 // pred_check
          %p243 = pneg %p88
        $region26: #{tpu_custom_call.1} parent=19 // pred_check_branch
          %245 = sbr.rel (%p243) target = $region28
        $region27: #{tpu_custom_call.1} parent=19 // pred_region
          %s246 = smul.u32 %s26, 8
          %s247 = ssub.s32 %s246, 1
          %p248 = scmp.gt.s32.totalorder %s247, 0
          %s249 = scalar_select %p248, %s247, 0
          %p250 = scmp.lt.s32.totalorder %s25, 1
          %s251 = scalar_select %p250, %s25, 1
          %p252 = scmp.lt.s32.totalorder %s249, 15
          %s253 = scalar_select %p252, %s249, 15
          %s254 = smul.addr %s253, 2
          %s255 = smul.addr %s251, 32
          %s256 = sadd.s32 %s254, %s255
          %s257 = smul.addr %s256, 8
          %s258 = scalar_lea.vmem %s1, %s257
          %s259 = smul.u32 %s26, 8
          %s260 = ssub.s32 %s259, 1
          %p261 = scmp.gt.s32.totalorder %s260, 0
          %s262 = scalar_select %p261, %s260, 0
        $region28: #{tpu_custom_call.1} parent=19 // pred_fallthru
          _
        // Predicated region
        $region29: #{tpu_custom_call.1} parent=19 // pred_check
          %p263 = pneg %p124
        $region30: #{tpu_custom_call.1} parent=19 // pred_check_branch
          %265 = sbr.rel (%p263) target = $region32
        $region31: #{tpu_custom_call.1} parent=19 // pred_region
          %s266 = smul.u32 %s26, 8
          %s267 = sadd.s32 %s266, 8
          %p268 = scmp.lt.s32.totalorder %s267, 15
          %s269 = scalar_select %p268, %s267, 15
          %p270 = scmp.lt.s32.totalorder %s25, 1
          %s271 = scalar_select %p270, %s25, 1
          %p272 = scmp.lt.s32.totalorder %s269, 15
          %s273 = scalar_select %p272, %s269, 15
          %s274 = smul.addr %s273, 2
          %s275 = smul.addr %s271, 32
          %s276 = sadd.s32 %s274, %s275
          %s277 = smul.addr %s276, 8
          %s278 = scalar_lea.vmem %s2, %s277
          %s279 = smul.u32 %s26, 8
          %s280 = sadd.s32 %s279, 8
          %p281 = scmp.lt.s32.totalorder %s280, 15
          %s282 = scalar_select %p281, %s280, 15
        $region32: #{tpu_custom_call.1} parent=19 // pred_fallthru
          _
      $region20: #{tpu_custom_call.1} parent=5 // pred_fallthru
        _
      %p283 = scmp.le.s32.totalorder 1, %s18
      %p284 = scmp.lt.s32.totalorder %s18, 5
      %p285 = pnand %p283, %p284
      %p286 = pneg %p285
      // Predicated region
      $region33: #{tpu_custom_call.1} parent=5 // pred_check
        _
      $region34: #{tpu_custom_call.1} parent=5 // pred_check_branch
        %288 = sbr.rel (%p285) target = $region36
      $region35: #{tpu_custom_call.1} parent=5 // pred_region
        %s289 = ssub.s32 %s18, 1
        %s290 = smul.u32 8, %s28
        %p291 = scmp.lt.s32.totalorder %s27, 1
        %s292 = scalar_select %p291, %s27, 1
        %p293 = scmp.lt.s32.totalorder %s290, 15
        %s294 = scalar_select %p293, %s290, 15
        %s295 = smul.addr %s294, 2
        %s296 = smul.addr %s292, 32
        %s297 = sadd.s32 %s295, %s296
        %s298 = smul.addr %s297, 8
        %s299 = scalar_lea.vmem %s0, %s298
        %p300 = pneg %p58
        %p301 = pneg %p55
        %s302 = smul.u32 %s28, 8
        %s303 = ssub.s32 %s302, 1
        %p304 = scmp.gt.s32.totalorder %s303, 0
        %s305 = scalar_select %p304, %s303, 0
        %p306 = scmp.lt.s32.totalorder %s27, 1
        %s307 = scalar_select %p306, %s27, 1
        %p308 = scmp.lt.s32.totalorder %s305, 15
        %s309 = scalar_select %p308, %s305, 15
        %s310 = smul.addr %s309, 2
        %s311 = smul.addr %s307, 32
        %s312 = sadd.s32 %s310, %s311
        %s313 = smul.addr %s312, 8
        %s314 = scalar_lea.vmem %s1, %s313
        %p315 = pneg %p94
        %p316 = pneg %p91
        %s317 = smul.u32 %s28, 8
        %s318 = sadd.s32 %s317, 8
        %p319 = scmp.lt.s32.totalorder %s318, 15
        %s320 = scalar_select %p319, %s318, 15
        %p321 = scmp.lt.s32.totalorder %s27, 1
        %s322 = scalar_select %p321, %s27, 1
        %p323 = scmp.lt.s32.totalorder %s320, 15
        %s324 = scalar_select %p323, %s320, 15
        %s325 = smul.addr %s324, 2
        %s326 = smul.addr %s322, 32
        %s327 = sadd.s32 %s325, %s326
        %s328 = smul.addr %s327, 8
        %s329 = scalar_lea.vmem %s2, %s328
        %p330 = pneg %p130
        %p331 = pneg %p127
        %p332 = pneg %p151
        %p333 = pneg %p148
        %p334 = pneg %p179
        %p335 = pneg %p176
        %s336 = sand.u32 %s166, 1
        %s337 = scalar_lea.sflag [#allocation3], %s336
        %s338 = sand.u32 %s166, 1
        %s339 = smul.addr %s338, 128
        %s340 = scalar_lea.vmem [#allocation2], %s339
        %p341 = pneg %p207
        %p342 = pneg %p204
        %s343 = sand.u32 %s194, 1
        %s344 = scalar_lea.sflag [#allocation5], %s343
        %s345 = sand.u32 %s194, 1
        %s346 = smul.addr %s345, 2
        %s347 = scalar_lea.vmem [#allocation4], %s346
        %s348 = smul.u32 8, %s28
        %p349 = scmp.lt.s32.totalorder %s27, 1
        %s350 = scalar_select %p349, %s27, 1
        %p351 = scmp.lt.s32.totalorder %s348, 15
        %s352 = scalar_select %p351, %s348, 15
        %s353 = smul.addr %s352, 2
        %s354 = smul.addr %s350, 32
        %s355 = sadd.s32 %s353, %s354
        %s356 = smul.addr %s355, 8
        %s357 = scalar_lea.vmem %s0, %s356
        %s358 = smul.u32 8, %s28
        %s359 = smul.u32 %s28, 8
        %s360 = ssub.s32 %s359, 1
        %p361 = scmp.gt.s32.totalorder %s360, 0
        %s362 = scalar_select %p361, %s360, 0
        %p363 = scmp.lt.s32.totalorder %s27, 1
        %s364 = scalar_select %p363, %s27, 1
        %p365 = scmp.lt.s32.totalorder %s362, 15
        %s366 = scalar_select %p365, %s362, 15
        %s367 = smul.addr %s366, 2
        %s368 = smul.addr %s364, 32
        %s369 = sadd.s32 %s367, %s368
        %s370 = smul.addr %s369, 8
        %s371 = scalar_lea.vmem %s1, %s370
        %s372 = smul.u32 %s28, 8
        %s373 = ssub.s32 %s372, 1
        %p374 = scmp.gt.s32.totalorder %s373, 0
        %s375 = scalar_select %p374, %s373, 0
        %s376 = smul.u32 %s28, 8
        %s377 = sadd.s32 %s376, 8
        %p378 = scmp.lt.s32.totalorder %s377, 15
        %s379 = scalar_select %p378, %s377, 15
        %p380 = scmp.lt.s32.totalorder %s27, 1
        %s381 = scalar_select %p380, %s27, 1
        %p382 = scmp.lt.s32.totalorder %s379, 15
        %s383 = scalar_select %p382, %s379, 15
        %s384 = smul.addr %s383, 2
        %s385 = smul.addr %s381, 32
        %s386 = sadd.s32 %s384, %s385
        %s387 = smul.addr %s386, 8
        %s388 = scalar_lea.vmem %s2, %s387
        %s389 = smul.u32 %s28, 8
        %s390 = sadd.s32 %s389, 8
        %p391 = scmp.lt.s32.totalorder %s390, 15
        %s392 = scalar_select %p391, %s390, 15
        %s393 = smul.u32 8, %s28
        %p394 = scmp.gt.s32.totalorder %s28, 0
        %s395 = scalar_select %p394, 1, 0
        %s396 = scvt.s32.f32 %s395
        %p397 = scmp.lt.s32.totalorder %s28, 1
        %s398 = scalar_select %p397, 1, 0
        %s399 = scvt.s32.f32 %s398
        %v400 = vld [vmem:[%s371] sm:$0xff]
        %v401 = vld [vmem:[%s371 + $0x8] sm:$0xff]
        %v402 = vstv %s396
        %v403 = vmul.f32 %v400, %v402
        %v404 = vmul.f32 %v401, %v402
        %v405 = vld [vmem:[%s388] sm:$0xff]
        %v406 = vld [vmem:[%s388 + $0x8] sm:$0xff]
        %v407 = vstv %s399
        %v408 = vmul.f32 %v405, %v407
        %v409 = vmul.f32 %v406, %v407
        %v410 = vld [vmem:[%s357] sm:$0xff]
        %v411 = vld [vmem:[%s357 + $0x8] sm:$0xff]
        %v412 = vld [vmem:[%s357 + $0x10] sm:$0xff]
        %v413 = vld [vmem:[%s357 + $0x18] sm:$0xff]
        %v414 = vld [vmem:[%s357 + $0x20] sm:$0xff]
        %v415 = vld [vmem:[%s357 + $0x28] sm:$0xff]
        %v416 = vld [vmem:[%s357 + $0x30] sm:$0xff]
        %v417 = vld [vmem:[%s357 + $0x38] sm:$0xff]
        %v418 = vld [vmem:[%s357 + $0x40] sm:$0xff]
        %v419 = vld [vmem:[%s357 + $0x48] sm:$0xff]
        %v420 = vld [vmem:[%s357 + $0x50] sm:$0xff]
        %v421 = vld [vmem:[%s357 + $0x58] sm:$0xff]
        %v422 = vld [vmem:[%s357 + $0x60] sm:$0xff]
        %v423 = vld [vmem:[%s357 + $0x68] sm:$0xff]
        %v424 = vld [vmem:[%s357 + $0x70] sm:$0xff]
        %v425 = vld [vmem:[%s357 + $0x78] sm:$0xff]
        %vm446 = vcmask 1040384
        %v447 = vrot.slane %v403, 7
        %v448 = vrot.slane %v404, 7
        %v449 = vsel %vm446, %v447, %v448
        %v450 = vrot.slane %v410, 7
        %v451 = vrot.slane %v411, 7
        %v452 = vsel %vm446, %v450, %v451
        %v453 = vrot.slane %v412, 7
        %v454 = vrot.slane %v413, 7
        %v455 = vsel %vm446, %v453, %v454
        %v456 = vrot.slane %v414, 7
        %v457 = vrot.slane %v415, 7
        %v458 = vsel %vm446, %v456, %v457
        %v459 = vrot.slane %v416, 7
        %v460 = vrot.slane %v417, 7
        %v461 = vsel %vm446, %v459, %v460
        %v462 = vrot.slane %v418, 7
        %v463 = vrot.slane %v419, 7
        %v464 = vsel %vm446, %v462, %v463
        %v465 = vrot.slane %v420, 7
        %v466 = vrot.slane %v421, 7
        %v467 = vsel %vm446, %v465, %v466
        %v468 = vrot.slane %v422, 7
        %v469 = vrot.slane %v423, 7
        %v470 = vsel %vm446, %v468, %v469
        %v471 = vrot.slane %v424, 7
        %v472 = vrot.slane %v425, 7
        %v473 = vsel %vm446, %v471, %v472
        %v474 = vrot.slane %v408, 7
        %v475 = vrot.slane %v409, 7
        %v476 = vsel %vm446, %v474, %v475
        %v505 = vsel %vm446, 0.0, %v447
        %v506 = vsel %vm446, 0.0, %v450
        %v507 = vsel %vm446, 0.0, %v453
        %v508 = vsel %vm446, 0.0, %v456
        %v509 = vsel %vm446, 0.0, %v459
        %v510 = vsel %vm446, 0.0, %v462
        %v511 = vsel %vm446, 0.0, %v465
        %v512 = vsel %vm446, 0.0, %v468
        %v513 = vsel %vm446, 0.0, %v471
        %v514 = vsel %vm446, 0.0, %v474
        %v515 = vsel %vm446, %v448, 0.0
        %v516 = vsel %vm446, %v451, 0.0
        %v517 = vsel %vm446, %v454, 0.0
        %v518 = vsel %vm446, %v457, 0.0
        %v519 = vsel %vm446, %v460, 0.0
        %v520 = vsel %vm446, %v463, 0.0
        %v521 = vsel %vm446, %v466, 0.0
        %v522 = vsel %vm446, %v469, 0.0
        %v523 = vsel %vm446, %v472, 0.0
        %v524 = vsel %vm446, %v475, 0.0
        %vm541 = vcmask 1046528
        %v542 = vrot.slane %v505, 1
        %v543 = vrot.slane %v449, 1
        %v544 = vsel %vm541, %v542, %v543
        %v545 = vrot.slane %v515, 1
        %v546 = vsel %vm541, %v543, %v545
        %v547 = vrot.slane %v506, 1
        %v548 = vrot.slane %v452, 1
        %v549 = vsel %vm541, %v547, %v548
        %v550 = vrot.slane %v516, 1
        %v551 = vsel %vm541, %v548, %v550
        %v552 = vrot.slane %v507, 1
        %v553 = vrot.slane %v455, 1
        %v554 = vsel %vm541, %v552, %v553
        %v555 = vrot.slane %v517, 1
        %v556 = vsel %vm541, %v553, %v555
        %v557 = vrot.slane %v508, 1
        %v558 = vrot.slane %v458, 1
        %v559 = vsel %vm541, %v557, %v558
        %v560 = vrot.slane %v518, 1
        %v561 = vsel %vm541, %v558, %v560
        %v562 = vrot.slane %v509, 1
        %v563 = vrot.slane %v461, 1
        %v564 = vsel %vm541, %v562, %v563
        %v565 = vrot.slane %v519, 1
        %v566 = vsel %vm541, %v563, %v565
        %v567 = vrot.slane %v510, 1
        %v568 = vrot.slane %v464, 1
        %v569 = vsel %vm541, %v567, %v568
        %v570 = vrot.slane %v520, 1
        %v571 = vsel %vm541, %v568, %v570
        %v572 = vrot.slane %v511, 1
        %v573 = vrot.slane %v467, 1
        %v574 = vsel %vm541, %v572, %v573
        %v575 = vrot.slane %v521, 1
        %v576 = vsel %vm541, %v573, %v575
        %v577 = vrot.slane %v512, 1
        %v578 = vrot.slane %v470, 1
        %v579 = vsel %vm541, %v577, %v578
        %v580 = vrot.slane %v522, 1
        %v581 = vsel %vm541, %v578, %v580
        %582 = vrot.lane.b32.xlu0 %v544, 4
        %v583 = vpop.permute.xlu0 %582
        %584 = vrot.lane.b32.xlu0 %v546, 4
        %v585 = vpop.permute.xlu0 %584
        %586 = vrot.lane.b32.xlu0 %v549, 4
        %v587 = vpop.permute.xlu0 %586
        %588 = vrot.lane.b32.xlu0 %v551, 4
        %v589 = vpop.permute.xlu0 %588
        %590 = vrot.lane.b32.xlu0 %v554, 4
        %v591 = vpop.permute.xlu0 %590
        %592 = vrot.lane.b32.xlu0 %v556, 4
        %v593 = vpop.permute.xlu0 %592
        %594 = vrot.lane.b32.xlu0 %v559, 4
        %v595 = vpop.permute.xlu0 %594
        %596 = vrot.lane.b32.xlu0 %v561, 4
        %v597 = vpop.permute.xlu0 %596
        %598 = vrot.lane.b32.xlu0 %v564, 4
        %v599 = vpop.permute.xlu0 %598
        %600 = vrot.lane.b32.xlu0 %v566, 4
        %v601 = vpop.permute.xlu0 %600
        %602 = vrot.lane.b32.xlu0 %v569, 4
        %v603 = vpop.permute.xlu0 %602
        %604 = vrot.lane.b32.xlu0 %v571, 4
        %v605 = vpop.permute.xlu0 %604
        %606 = vrot.lane.b32.xlu0 %v574, 4
        %v607 = vpop.permute.xlu0 %606
        %608 = vrot.lane.b32.xlu0 %v576, 4
        %v609 = vpop.permute.xlu0 %608
        %610 = vrot.lane.b32.xlu0 %v579, 4
        %v611 = vpop.permute.xlu0 %610
        %612 = vrot.lane.b32.xlu0 %v581, 4
        %v613 = vpop.permute.xlu0 %612
        %vm630 = vcmask 1045504
        %v631 = vrot.slane %v505, 2
        %v632 = vrot.slane %v449, 2
        %v633 = vsel %vm630, %v631, %v632
        %v634 = vrot.slane %v515, 2
        %v635 = vsel %vm630, %v632, %v634
        %v636 = vrot.slane %v506, 2
        %v637 = vrot.slane %v452, 2
        %v638 = vsel %vm630, %v636, %v637
        %v639 = vrot.slane %v516, 2
        %v640 = vsel %vm630, %v637, %v639
        %v641 = vrot.slane %v507, 2
        %v642 = vrot.slane %v455, 2
        %v643 = vsel %vm630, %v641, %v642
        %v644 = vrot.slane %v517, 2
        %v645 = vsel %vm630, %v642, %v644
        %v646 = vrot.slane %v508, 2
        %v647 = vrot.slane %v458, 2
        %v648 = vsel %vm630, %v646, %v647
        %v649 = vrot.slane %v518, 2
        %v650 = vsel %vm630, %v647, %v649
        %v651 = vrot.slane %v509, 2
        %v652 = vrot.slane %v461, 2
        %v653 = vsel %vm630, %v651, %v652
        %v654 = vrot.slane %v519, 2
        %v655 = vsel %vm630, %v652, %v654
        %v656 = vrot.slane %v510, 2
        %v657 = vrot.slane %v464, 2
        %v658 = vsel %vm630, %v656, %v657
        %v659 = vrot.slane %v520, 2
        %v660 = vsel %vm630, %v657, %v659
        %v661 = vrot.slane %v511, 2
        %v662 = vrot.slane %v467, 2
        %v663 = vsel %vm630, %v661, %v662
        %v664 = vrot.slane %v521, 2
        %v665 = vsel %vm630, %v662, %v664
        %v666 = vrot.slane %v512, 2
        %v667 = vrot.slane %v470, 2
        %v668 = vsel %vm630, %v666, %v667
        %v669 = vrot.slane %v522, 2
        %v670 = vsel %vm630, %v667, %v669
        %671 = vrot.lane.b32.xlu0 %v633, 8
        %v672 = vpop.permute.xlu0 %671
        %673 = vrot.lane.b32.xlu0 %v635, 8
        %v674 = vpop.permute.xlu0 %673
        %675 = vrot.lane.b32.xlu0 %v638, 8
        %v676 = vpop.permute.xlu0 %675
        %677 = vrot.lane.b32.xlu0 %v640, 8
        %v678 = vpop.permute.xlu0 %677
        %679 = vrot.lane.b32.xlu0 %v643, 8
        %v680 = vpop.permute.xlu0 %679
        %681 = vrot.lane.b32.xlu0 %v645, 8
        %v682 = vpop.permute.xlu0 %681
        %683 = vrot.lane.b32.xlu0 %v648, 8
        %v684 = vpop.permute.xlu0 %683
        %685 = vrot.lane.b32.xlu0 %v650, 8
        %v686 = vpop.permute.xlu0 %685
        %687 = vrot.lane.b32.xlu0 %v653, 8
        %v688 = vpop.permute.xlu0 %687
        %689 = vrot.lane.b32.xlu0 %v655, 8
        %v690 = vpop.permute.xlu0 %689
        %691 = vrot.lane.b32.xlu0 %v658, 8
        %v692 = vpop.permute.xlu0 %691
        %693 = vrot.lane.b32.xlu0 %v660, 8
        %v694 = vpop.permute.xlu0 %693
        %695 = vrot.lane.b32.xlu0 %v663, 8
        %v696 = vpop.permute.xlu0 %695
        %697 = vrot.lane.b32.xlu0 %v665, 8
        %v698 = vpop.permute.xlu0 %697
        %699 = vrot.lane.b32.xlu0 %v668, 8
        %v700 = vpop.permute.xlu0 %699
        %701 = vrot.lane.b32.xlu0 %v670, 8
        %v702 = vpop.permute.xlu0 %701
        %720 = vrot.lane.b32.xlu0 %v506, 12
        %v721 = vpop.permute.xlu0 %720
        %722 = vrot.lane.b32.xlu0 %v452, 12
        %v723 = vpop.permute.xlu0 %722
        %724 = vrot.lane.b32.xlu0 %v507, 12
        %v725 = vpop.permute.xlu0 %724
        %726 = vrot.lane.b32.xlu0 %v455, 12
        %v727 = vpop.permute.xlu0 %726
        %728 = vrot.lane.b32.xlu0 %v508, 12
        %v729 = vpop.permute.xlu0 %728
        %730 = vrot.lane.b32.xlu0 %v458, 12
        %v731 = vpop.permute.xlu0 %730
        %732 = vrot.lane.b32.xlu0 %v509, 12
        %v733 = vpop.permute.xlu0 %732
        %734 = vrot.lane.b32.xlu0 %v461, 12
        %v735 = vpop.permute.xlu0 %734
        %736 = vrot.lane.b32.xlu0 %v510, 12
        %v737 = vpop.permute.xlu0 %736
        %738 = vrot.lane.b32.xlu0 %v464, 12
        %v739 = vpop.permute.xlu0 %738
        %740 = vrot.lane.b32.xlu0 %v511, 12
        %v741 = vpop.permute.xlu0 %740
        %742 = vrot.lane.b32.xlu0 %v467, 12
        %v743 = vpop.permute.xlu0 %742
        %744 = vrot.lane.b32.xlu0 %v512, 12
        %v745 = vpop.permute.xlu0 %744
        %746 = vrot.lane.b32.xlu0 %v470, 12
        %v747 = vpop.permute.xlu0 %746
        %748 = vrot.lane.b32.xlu0 %v513, 12
        %v749 = vpop.permute.xlu0 %748
        %750 = vrot.lane.b32.xlu0 %v473, 12
        %v751 = vpop.permute.xlu0 %750
        %v769 = vrot.slane %v513, 1
        %v770 = vrot.slane %v473, 1
        %v771 = vsel %vm541, %v769, %v770
        %v772 = vrot.slane %v523, 1
        %v773 = vsel %vm541, %v770, %v772
        %774 = vrot.lane.b32.xlu0 %v549, 16
        %v775 = vpop.permute.xlu0 %774
        %776 = vrot.lane.b32.xlu0 %v551, 16
        %v777 = vpop.permute.xlu0 %776
        %778 = vrot.lane.b32.xlu0 %v554, 16
        %v779 = vpop.permute.xlu0 %778
        %780 = vrot.lane.b32.xlu0 %v556, 16
        %v781 = vpop.permute.xlu0 %780
        %782 = vrot.lane.b32.xlu0 %v559, 16
        %v783 = vpop.permute.xlu0 %782
        %784 = vrot.lane.b32.xlu0 %v561, 16
        %v785 = vpop.permute.xlu0 %784
        %786 = vrot.lane.b32.xlu0 %v564, 16
        %v787 = vpop.permute.xlu0 %786
        %788 = vrot.lane.b32.xlu0 %v566, 16
        %v789 = vpop.permute.xlu0 %788
        %790 = vrot.lane.b32.xlu0 %v569, 16
        %v791 = vpop.permute.xlu0 %790
        %792 = vrot.lane.b32.xlu0 %v571, 16
        %v793 = vpop.permute.xlu0 %792
        %794 = vrot.lane.b32.xlu0 %v574, 16
        %v795 = vpop.permute.xlu0 %794
        %796 = vrot.lane.b32.xlu0 %v576, 16
        %v797 = vpop.permute.xlu0 %796
        %798 = vrot.lane.b32.xlu0 %v579, 16
        %v799 = vpop.permute.xlu0 %798
        %800 = vrot.lane.b32.xlu0 %v581, 16
        %v801 = vpop.permute.xlu0 %800
        %802 = vrot.lane.b32.xlu0 %v771, 16
        %v803 = vpop.permute.xlu0 %802
        %804 = vrot.lane.b32.xlu0 %v773, 16
        %v805 = vpop.permute.xlu0 %804
        %v822 = vrot.slane %v513, 2
        %v823 = vrot.slane %v473, 2
        %v824 = vsel %vm630, %v822, %v823
        %v825 = vrot.slane %v523, 2
        %v826 = vsel %vm630, %v823, %v825
        %827 = vrot.lane.b32.xlu0 %v638, 20
        %v828 = vpop.permute.xlu0 %827
        %829 = vrot.lane.b32.xlu0 %v640, 20
        %v830 = vpop.permute.xlu0 %829
        %831 = vrot.lane.b32.xlu0 %v643, 20
        %v832 = vpop.permute.xlu0 %831
        %833 = vrot.lane.b32.xlu0 %v645, 20
        %v834 = vpop.permute.xlu0 %833
        %835 = vrot.lane.b32.xlu0 %v648, 20
        %v836 = vpop.permute.xlu0 %835
        %837 = vrot.lane.b32.xlu0 %v650, 20
        %v838 = vpop.permute.xlu0 %837
        %839 = vrot.lane.b32.xlu0 %v653, 20
        %v840 = vpop.permute.xlu0 %839
        %841 = vrot.lane.b32.xlu0 %v655, 20
        %v842 = vpop.permute.xlu0 %841
        %843 = vrot.lane.b32.xlu0 %v658, 20
        %v844 = vpop.permute.xlu0 %843
        %845 = vrot.lane.b32.xlu0 %v660, 20
        %v846 = vpop.permute.xlu0 %845
        %847 = vrot.lane.b32.xlu0 %v663, 20
        %v848 = vpop.permute.xlu0 %847
        %849 = vrot.lane.b32.xlu0 %v665, 20
        %v850 = vpop.permute.xlu0 %849
        %851 = vrot.lane.b32.xlu0 %v668, 20
        %v852 = vpop.permute.xlu0 %851
        %853 = vrot.lane.b32.xlu0 %v670, 20
        %v854 = vpop.permute.xlu0 %853
        %855 = vrot.lane.b32.xlu0 %v824, 20
        %v856 = vpop.permute.xlu0 %855
        %857 = vrot.lane.b32.xlu0 %v826, 20
        %v858 = vpop.permute.xlu0 %857
        %876 = vrot.lane.b32.xlu0 %v507, 24
        %v877 = vpop.permute.xlu0 %876
        %878 = vrot.lane.b32.xlu0 %v455, 24
        %v879 = vpop.permute.xlu0 %878
        %880 = vrot.lane.b32.xlu0 %v508, 24
        %v881 = vpop.permute.xlu0 %880
        %882 = vrot.lane.b32.xlu0 %v458, 24
        %v883 = vpop.permute.xlu0 %882
        %884 = vrot.lane.b32.xlu0 %v509, 24
        %v885 = vpop.permute.xlu0 %884
        %886 = vrot.lane.b32.xlu0 %v461, 24
        %v887 = vpop.permute.xlu0 %886
        %888 = vrot.lane.b32.xlu0 %v510, 24
        %v889 = vpop.permute.xlu0 %888
        %890 = vrot.lane.b32.xlu0 %v464, 24
        %v891 = vpop.permute.xlu0 %890
        %892 = vrot.lane.b32.xlu0 %v511, 24
        %v893 = vpop.permute.xlu0 %892
        %894 = vrot.lane.b32.xlu0 %v467, 24
        %v895 = vpop.permute.xlu0 %894
        %896 = vrot.lane.b32.xlu0 %v512, 24
        %v897 = vpop.permute.xlu0 %896
        %898 = vrot.lane.b32.xlu0 %v470, 24
        %v899 = vpop.permute.xlu0 %898
        %900 = vrot.lane.b32.xlu0 %v513, 24
        %v901 = vpop.permute.xlu0 %900
        %902 = vrot.lane.b32.xlu0 %v473, 24
        %v903 = vpop.permute.xlu0 %902
        %904 = vrot.lane.b32.xlu0 %v514, 24
        %v905 = vpop.permute.xlu0 %904
        %906 = vrot.lane.b32.xlu0 %v476, 24
        %v907 = vpop.permute.xlu0 %906
        %v925 = vrot.slane %v514, 1
        %v926 = vrot.slane %v476, 1
        %v927 = vsel %vm541, %v925, %v926
        %v928 = vrot.slane %v524, 1
        %v929 = vsel %vm541, %v926, %v928
        %930 = vrot.lane.b32.xlu0 %v554, 28
        %v931 = vpop.permute.xlu0 %930
        %932 = vrot.lane.b32.xlu0 %v556, 28
        %v933 = vpop.permute.xlu0 %932
        %934 = vrot.lane.b32.xlu0 %v559, 28
        %v935 = vpop.permute.xlu0 %934
        %936 = vrot.lane.b32.xlu0 %v561, 28
        %v937 = vpop.permute.xlu0 %936
        %938 = vrot.lane.b32.xlu0 %v564, 28
        %v939 = vpop.permute.xlu0 %938
        %940 = vrot.lane.b32.xlu0 %v566, 28
        %v941 = vpop.permute.xlu0 %940
        %942 = vrot.lane.b32.xlu0 %v569, 28
        %v943 = vpop.permute.xlu0 %942
        %944 = vrot.lane.b32.xlu0 %v571, 28
        %v945 = vpop.permute.xlu0 %944
        %946 = vrot.lane.b32.xlu0 %v574, 28
        %v947 = vpop.permute.xlu0 %946
        %948 = vrot.lane.b32.xlu0 %v576, 28
        %v949 = vpop.permute.xlu0 %948
        %950 = vrot.lane.b32.xlu0 %v579, 28
        %v951 = vpop.permute.xlu0 %950
        %952 = vrot.lane.b32.xlu0 %v581, 28
        %v953 = vpop.permute.xlu0 %952
        %954 = vrot.lane.b32.xlu0 %v771, 28
        %v955 = vpop.permute.xlu0 %954
        %956 = vrot.lane.b32.xlu0 %v773, 28
        %v957 = vpop.permute.xlu0 %956
        %958 = vrot.lane.b32.xlu0 %v927, 28
        %v959 = vpop.permute.xlu0 %958
        %960 = vrot.lane.b32.xlu0 %v929, 28
        %v961 = vpop.permute.xlu0 %960
        %v978 = vrot.slane %v514, 2
        %v979 = vrot.slane %v476, 2
        %v980 = vsel %vm630, %v978, %v979
        %v981 = vrot.slane %v524, 2
        %v982 = vsel %vm630, %v979, %v981
        %983 = vrot.lane.b32.xlu0 %v643, 32
        %v984 = vpop.permute.xlu0 %983
        %985 = vrot.lane.b32.xlu0 %v645, 32
        %v986 = vpop.permute.xlu0 %985
        %987 = vrot.lane.b32.xlu0 %v648, 32
        %v988 = vpop.permute.xlu0 %987
        %989 = vrot.lane.b32.xlu0 %v650, 32
        %v990 = vpop.permute.xlu0 %989
        %991 = vrot.lane.b32.xlu0 %v653, 32
        %v992 = vpop.permute.xlu0 %991
        %993 = vrot.lane.b32.xlu0 %v655, 32
        %v994 = vpop.permute.xlu0 %993
        %995 = vrot.lane.b32.xlu0 %v658, 32
        %v996 = vpop.permute.xlu0 %995
        %997 = vrot.lane.b32.xlu0 %v660, 32
        %v998 = vpop.permute.xlu0 %997
        %999 = vrot.lane.b32.xlu0 %v663, 32
        %v1000 = vpop.permute.xlu0 %999
        %1001 = vrot.lane.b32.xlu0 %v665, 32
        %v1002 = vpop.permute.xlu0 %1001
        %1003 = vrot.lane.b32.xlu0 %v668, 32
        %v1004 = vpop.permute.xlu0 %1003
        %1005 = vrot.lane.b32.xlu0 %v670, 32
        %v1006 = vpop.permute.xlu0 %1005
        %1007 = vrot.lane.b32.xlu0 %v824, 32
        %v1008 = vpop.permute.xlu0 %1007
        %1009 = vrot.lane.b32.xlu0 %v826, 32
        %v1010 = vpop.permute.xlu0 %1009
        %1011 = vrot.lane.b32.xlu0 %v980, 32
        %v1012 = vpop.permute.xlu0 %1011
        %1013 = vrot.lane.b32.xlu0 %v982, 32
        %v1014 = vpop.permute.xlu0 %1013
        %vm1031 = vcmask 31744
        %v1032 = vsel %vm1031, %v505, %v583
        %v1033 = vsel %vm1031, %v449, %v585
        %v1034 = vsel %vm1031, %v506, %v587
        %v1035 = vsel %vm1031, %v452, %v589
        %v1036 = vsel %vm1031, %v507, %v591
        %v1037 = vsel %vm1031, %v455, %v593
        %v1038 = vsel %vm1031, %v508, %v595
        %v1039 = vsel %vm1031, %v458, %v597
        %v1040 = vsel %vm1031, %v509, %v599
        %v1041 = vsel %vm1031, %v461, %v601
        %v1042 = vsel %vm1031, %v510, %v603
        %v1043 = vsel %vm1031, %v464, %v605
        %v1044 = vsel %vm1031, %v511, %v607
        %v1045 = vsel %vm1031, %v467, %v609
        %v1046 = vsel %vm1031, %v512, %v611
        %v1047 = vsel %vm1031, %v470, %v613
        %vm1048 = vcmask 64512
        %v1049 = vsel %vm1048, %v1032, %v672
        %v1050 = vsel %vm1048, %v1033, %v674
        %v1051 = vsel %vm1048, %v1034, %v676
        %v1052 = vsel %vm1048, %v1035, %v678
        %v1053 = vsel %vm1048, %v1036, %v680
        %v1054 = vsel %vm1048, %v1037, %v682
        %v1055 = vsel %vm1048, %v1038, %v684
        %v1056 = vsel %vm1048, %v1039, %v686
        %v1057 = vsel %vm1048, %v1040, %v688
        %v1058 = vsel %vm1048, %v1041, %v690
        %v1059 = vsel %vm1048, %v1042, %v692
        %v1060 = vsel %vm1048, %v1043, %v694
        %v1061 = vsel %vm1048, %v1044, %v696
        %v1062 = vsel %vm1048, %v1045, %v698
        %v1063 = vsel %vm1048, %v1046, %v700
        %v1064 = vsel %vm1048, %v1047, %v702
        %vm1065 = vcmask 97280
        %v1066 = vsel %vm1065, %v1049, %v721
        %v1067 = vsel %vm1065, %v1050, %v723
        %v1068 = vsel %vm1065, %v1051, %v725
        %v1069 = vsel %vm1065, %v1052, %v727
        %v1070 = vsel %vm1065, %v1053, %v729
        %v1071 = vsel %vm1065, %v1054, %v731
        %v1072 = vsel %vm1065, %v1055, %v733
        %v1073 = vsel %vm1065, %v1056, %v735
        %v1074 = vsel %vm1065, %v1057, %v737
        %v1075 = vsel %vm1065, %v1058, %v739
        %v1076 = vsel %vm1065, %v1059, %v741
        %v1077 = vsel %vm1065, %v1060, %v743
        %v1078 = vsel %vm1065, %v1061, %v745
        %v1079 = vsel %vm1065, %v1062, %v747
        %v1080 = vsel %vm1065, %v1063, %v749
        %v1081 = vsel %vm1065, %v1064, %v751
        %vm1082 = vcmask 130048
        %v1083 = vsel %vm1082, %v1066, %v775
        %v1084 = vsel %vm1082, %v1067, %v777
        %v1085 = vsel %vm1082, %v1068, %v779
        %v1086 = vsel %vm1082, %v1069, %v781
        %v1087 = vsel %vm1082, %v1070, %v783
        %v1088 = vsel %vm1082, %v1071, %v785
        %v1089 = vsel %vm1082, %v1072, %v787
        %v1090 = vsel %vm1082, %v1073, %v789
        %v1091 = vsel %vm1082, %v1074, %v791
        %v1092 = vsel %vm1082, %v1075, %v793
        %v1093 = vsel %vm1082, %v1076, %v795
        %v1094 = vsel %vm1082, %v1077, %v797
        %v1095 = vsel %vm1082, %v1078, %v799
        %v1096 = vsel %vm1082, %v1079, %v801
        %v1097 = vsel %vm1082, %v1080, %v803
        %v1098 = vsel %vm1082, %v1081, %v805
        %vm1099 = vcmask 162816
        %v1100 = vsel %vm1099, %v1083, %v828
        %v1101 = vsel %vm1099, %v1084, %v830
        %v1102 = vsel %vm1099, %v1085, %v832
        %v1103 = vsel %vm1099, %v1086, %v834
        %v1104 = vsel %vm1099, %v1087, %v836
        %v1105 = vsel %vm1099, %v1088, %v838
        %v1106 = vsel %vm1099, %v1089, %v840
        %v1107 = vsel %vm1099, %v1090, %v842
        %v1108 = vsel %vm1099, %v1091, %v844
        %v1109 = vsel %vm1099, %v1092, %v846
        %v1110 = vsel %vm1099, %v1093, %v848
        %v1111 = vsel %vm1099, %v1094, %v850
        %v1112 = vsel %vm1099, %v1095, %v852
        %v1113 = vsel %vm1099, %v1096, %v854
        %v1114 = vsel %vm1099, %v1097, %v856
        %v1115 = vsel %vm1099, %v1098, %v858
        %vm1116 = vcmask 195584
        %v1117 = vsel %vm1116, %v1100, %v877
        %v1118 = vsel %vm1116, %v1101, %v879
        %v1119 = vsel %vm1116, %v1102, %v881
        %v1120 = vsel %vm1116, %v1103, %v883
        %v1121 = vsel %vm1116, %v1104, %v885
        %v1122 = vsel %vm1116, %v1105, %v887
        %v1123 = vsel %vm1116, %v1106, %v889
        %v1124 = vsel %vm1116, %v1107, %v891
        %v1125 = vsel %vm1116, %v1108, %v893
        %v1126 = vsel %vm1116, %v1109, %v895
        %v1127 = vsel %vm1116, %v1110, %v897
        %v1128 = vsel %vm1116, %v1111, %v899
        %v1129 = vsel %vm1116, %v1112, %v901
        %v1130 = vsel %vm1116, %v1113, %v903
        %v1131 = vsel %vm1116, %v1114, %v905
        %v1132 = vsel %vm1116, %v1115, %v907
        %vm1133 = vcmask 228352
        %v1134 = vsel %vm1133, %v1117, %v931
        %v1135 = vsel %vm1133, %v1118, %v933
        %v1136 = vsel %vm1133, %v1119, %v935
        %v1137 = vsel %vm1133, %v1120, %v937
        %v1138 = vsel %vm1133, %v1121, %v939
        %v1139 = vsel %vm1133, %v1122, %v941
        %v1140 = vsel %vm1133, %v1123, %v943
        %v1141 = vsel %vm1133, %v1124, %v945
        %v1142 = vsel %vm1133, %v1125, %v947
        %v1143 = vsel %vm1133, %v1126, %v949
        %v1144 = vsel %vm1133, %v1127, %v951
        %v1145 = vsel %vm1133, %v1128, %v953
        %v1146 = vsel %vm1133, %v1129, %v955
        %v1147 = vsel %vm1133, %v1130, %v957
        %v1148 = vsel %vm1133, %v1131, %v959
        %v1149 = vsel %vm1133, %v1132, %v961
        %vm1150 = vcmask 261120
        %v1151 = vsel %vm1150, %v1134, %v984
        %v1152 = vsel %vm1150, %v1135, %v986
        %v1153 = vsel %vm1150, %v1136, %v988
        %v1154 = vsel %vm1150, %v1137, %v990
        %v1155 = vsel %vm1150, %v1138, %v992
        %v1156 = vsel %vm1150, %v1139, %v994
        %v1157 = vsel %vm1150, %v1140, %v996
        %v1158 = vsel %vm1150, %v1141, %v998
        %v1159 = vsel %vm1150, %v1142, %v1000
        %v1160 = vsel %vm1150, %v1143, %v1002
        %v1161 = vsel %vm1150, %v1144, %v1004
        %v1162 = vsel %vm1150, %v1145, %v1006
        %v1163 = vsel %vm1150, %v1146, %v1008
        %v1164 = vsel %vm1150, %v1147, %v1010
        %v1165 = vsel %vm1150, %v1148, %v1012
        %v1166 = vsel %vm1150, %v1149, %v1014
        %v1167 = vld [vmem:[%s3] sm:$0xff]
        %v1168 = vld [vmem:[%s3 + $0x8] sm:$0xff]
        %v1169 = vld [vmem:[%s3 + $0x10] sm:$0xff]
        %v1170 = vld [vmem:[%s3 + $0x18] sm:$0xff]
        %v1171 = vld [vmem:[%s3 + $0x20] sm:$0xf]
        %vm1172 = vcmask 293888
        %v1174 = vsel %vm1172, %v1151, 0
        %v1177 = vsel %vm1172, %v1152, 0
        %v1180 = vsel %vm1172, %v1153, 0
        %v1183 = vsel %vm1172, %v1154, 0
        %v1186 = vsel %vm1172, %v1155, 0
        %v1189 = vsel %vm1172, %v1156, 0
        %v1192 = vsel %vm1172, %v1157, 0
        %v1195 = vsel %vm1172, %v1158, 0
        %v1198 = vsel %vm1172, %v1159, 0
        %v1201 = vsel %vm1172, %v1160, 0
        %v1204 = vsel %vm1172, %v1161, 0
        %v1207 = vsel %vm1172, %v1162, 0
        %v1210 = vsel %vm1172, %v1163, 0
        %v1213 = vsel %vm1172, %v1164, 0
        %v1216 = vsel %vm1172, %v1165, 0
        %v1219 = vsel %vm1172, %v1166, 0
        %vm1221 = vcmask 1043456
        %v1223 = vsel %vm1221, %v1171, 0
        %1225 = vmatprep.subr.mxu0 0.0
        %1226 = vmatpush1.msra.mxu0 %v1167
        %1227 = vmatprep.subr.mxu0 0.0
        %1228 = vmatpush1.msra.mxu0 %v1168
        %1229 = vmatprep.subr.mxu0 0.0
        %1230 = vmatpush1.msra.mxu0 %v1169
        %1231 = vmatprep.subr.mxu0 0.0
        %1232 = vmatpush1.msra.mxu0 %v1170
        %1233 = vmatprep.subr.mxu0 0.0
        %1234 = vmatpush1.msra.mxu0 %v1223
        %1235 = vmatprep.subr.mxu0 0.0
        %1236 = vmatpush1.msra.mxu0 0.0
        %1237 = vmatprep.subr.mxu0 0.0
        %1238 = vmatpush1.msra.mxu0 0.0
        %1239 = vmatprep.subr.mxu0 0.0
        %1240 = vmatpush1.msra.mxu0 0.0
        %1241 = vmatprep.subr.mxu0 0.0
        %1242 = vmatpush1.msra.mxu0 0.0
        %1243 = vmatprep.subr.mxu0 0.0
        %1244 = vmatpush1.msra.mxu0 0.0
        %1245 = vmatprep.subr.mxu0 0.0
        %1246 = vmatpush1.msra.mxu0 0.0
        %1247 = vmatprep.subr.mxu0 0.0
        %1248 = vmatpush1.msra.mxu0 0.0
        %1249 = vmatprep.subr.mxu0 0.0
        %1250 = vmatpush1.msra.mxu0 0.0
        %1251 = vmatprep.subr.mxu0 0.0
        %1252 = vmatpush1.msra.mxu0 0.0
        %1253 = vmatprep.subr.mxu0 0.0
        %1254 = vmatpush1.msra.mxu0 0.0
        %1255 = vmatprep.subr.mxu0 0.0
        %1256 = vmatpush1.msra.mxu0 0.0
        %1257 = vmatprep.subr.mxu0 0.0
        %1258 = vmatpush1.msra.mxu0 0.0
        %1259 = vmatprep.subr.mxu0 0.0
        %1260 = vmatpush1.msra.mxu0 0.0
        %1261 = vmatprep.subr.mxu0 0.0
        %1262 = vmatpush1.msra.mxu0 0.0
        %1263 = vmatprep.subr.mxu0 0.0
        %1264 = vmatpush1.msra.mxu0 0.0
        %1265 = vmatprep.subr.mxu0 0.0
        %1266 = vmatpush1.msra.mxu0 0.0
        %1267 = vmatprep.subr.mxu0 0.0
        %1268 = vmatpush1.msra.mxu0 0.0
        %1269 = vmatprep.subr.mxu0 0.0
        %1270 = vmatpush1.msra.mxu0 0.0
        %1271 = vmatprep.subr.mxu0 0.0
        %1272 = vmatpush1.msra.mxu0 0.0
        %1273 = vmatprep.subr.mxu0 0.0
        %1274 = vmatpush1.msra.mxu0 0.0
        %1275 = vmatprep.subr.mxu0 0.0
        %1276 = vmatpush1.msra.mxu0 0.0
        %1277 = vmatprep.subr.mxu0 0.0
        %1278 = vmatpush1.msra.mxu0 0.0
        %1279 = vmatprep.subr.mxu0 0.0
        %1280 = vmatpush1.msra.mxu0 0.0
        %1281 = vmatprep.subr.mxu0 0.0
        %1282 = vmatpush1.msra.mxu0 0.0
        %1283 = vmatprep.subr.mxu0 0.0
        %1284 = vmatpush1.msra.mxu0 0.0
        %1285 = vmatprep.subr.mxu0 0.0
        %1286 = vmatpush1.msra.mxu0 0.0
        %1287 = vmatprep.subr.mxu0 0.0
        %1288 = vmatpush1.msra.mxu0 0.0
        %1289 = vmatprep.mubr.f32.mxu0 0.0
        %1290 = vmatmul.mubr.f32.gmra.mrb[0].mxu0 %v1174
        %v1291 = vpop.f32.mrb[0].mxu0
        %v1292 = vadd.f32 0.0, %v1291
        %v1293 = vpop.f32.mrb[0].mxu0
        %1294 = vmatprep.mubr.f32.mxu0 0.0
        %1295 = vmatmul.mubr.f32.gmra.mrb[0].mxu0 %v1177
        %v1296 = vpop.f32.mrb[0].mxu0
        %v1297 = vadd.f32 0.0, %v1296
        %v1298 = vpop.f32.mrb[0].mxu0
        %1299 = vmatprep.mubr.f32.mxu0 0.0
        %1300 = vmatmul.mubr.f32.gmra.mrb[0].mxu0 %v1180
        %v1301 = vpop.f32.mrb[0].mxu0
        %v1302 = vadd.f32 0.0, %v1301
        %v1303 = vpop.f32.mrb[0].mxu0
        %1304 = vmatprep.mubr.f32.mxu0 0.0
        %1305 = vmatmul.mubr.f32.gmra.mrb[0].mxu0 %v1183
        %v1306 = vpop.f32.mrb[0].mxu0
        %v1307 = vadd.f32 0.0, %v1306
        %v1308 = vpop.f32.mrb[0].mxu0
        %1309 = vmatprep.mubr.f32.mxu0 0.0
        %1310 = vmatmul.mubr.f32.gmra.mrb[0].mxu0 %v1186
        %v1311 = vpop.f32.mrb[0].mxu0
        %v1312 = vadd.f32 0.0, %v1311
        %v1313 = vpop.f32.mrb[0].mxu0
        %1314 = vmatprep.mubr.f32.mxu0 0.0
        %1315 = vmatmul.mubr.f32.gmra.mrb[0].mxu0 %v1189
        %v1316 = vpop.f32.mrb[0].mxu0
        %v1317 = vadd.f32 0.0, %v1316
        %v1318 = vpop.f32.mrb[0].mxu0
        %1319 = vmatprep.mubr.f32.mxu0 0.0
        %1320 = vmatmul.mubr.f32.gmra.mrb[0].mxu0 %v1192
        %v1321 = vpop.f32.mrb[0].mxu0
        %v1322 = vadd.f32 0.0, %v1321
        %v1323 = vpop.f32.mrb[0].mxu0
        %1324 = vmatprep.mubr.f32.mxu0 0.0
        %1325 = vmatmul.mubr.f32.gmra.mrb[0].mxu0 %v1195
        %v1326 = vpop.f32.mrb[0].mxu0
        %v1327 = vadd.f32 0.0, %v1326
        %v1328 = vpop.f32.mrb[0].mxu0
        %1329 = vmatprep.mubr.f32.mxu0 0.0
        %1330 = vmatmul.mubr.f32.gmra.mrb[0].mxu0 %v1198
        %v1331 = vpop.f32.mrb[0].mxu0
        %v1332 = vadd.f32 0.0, %v1331
        %v1333 = vpop.f32.mrb[0].mxu0
        %1334 = vmatprep.mubr.f32.mxu0 0.0
        %1335 = vmatmul.mubr.f32.gmra.mrb[0].mxu0 %v1201
        %v1336 = vpop.f32.mrb[0].mxu0
        %v1337 = vadd.f32 0.0, %v1336
        %v1338 = vpop.f32.mrb[0].mxu0
        %1339 = vmatprep.mubr.f32.mxu0 0.0
        %1340 = vmatmul.mubr.f32.gmra.mrb[0].mxu0 %v1204
        %v1341 = vpop.f32.mrb[0].mxu0
        %v1342 = vadd.f32 0.0, %v1341
        %v1343 = vpop.f32.mrb[0].mxu0
        %1344 = vmatprep.mubr.f32.mxu0 0.0
        %1345 = vmatmul.mubr.f32.gmra.mrb[0].mxu0 %v1207
        %v1346 = vpop.f32.mrb[0].mxu0
        %v1347 = vadd.f32 0.0, %v1346
        %v1348 = vpop.f32.mrb[0].mxu0
        %1349 = vmatprep.mubr.f32.mxu0 0.0
        %1350 = vmatmul.mubr.f32.gmra.mrb[0].mxu0 %v1210
        %v1351 = vpop.f32.mrb[0].mxu0
        %v1352 = vadd.f32 0.0, %v1351
        %v1353 = vpop.f32.mrb[0].mxu0
        %1354 = vmatprep.mubr.f32.mxu0 0.0
        %1355 = vmatmul.mubr.f32.gmra.mrb[0].mxu0 %v1213
        %v1356 = vpop.f32.mrb[0].mxu0
        %v1357 = vadd.f32 0.0, %v1356
        %v1358 = vpop.f32.mrb[0].mxu0
        %1359 = vmatprep.mubr.f32.mxu0 0.0
        %1360 = vmatmul.mubr.f32.gmra.mrb[0].mxu0 %v1216
        %v1361 = vpop.f32.mrb[0].mxu0
        %v1362 = vadd.f32 0.0, %v1361
        %v1363 = vpop.f32.mrb[0].mxu0
        %1364 = vmatprep.mubr.f32.mxu0 0.0
        %1365 = vmatmul.mubr.f32.gmra.mrb[0].mxu0 %v1219
        %v1366 = vpop.f32.mrb[0].mxu0
        %v1367 = vadd.f32 0.0, %v1366
        %v1368 = vpop.f32.mrb[0].mxu0
        %1369 = vdwg.mxu0
        %1370 = vst [vmem:[%s340] sm:$0xff] %v1292
        %1371 = vst [vmem:[%s340 + $0x8] sm:$0xff] %v1297
        %1372 = vst [vmem:[%s340 + $0x10] sm:$0xff] %v1302
        %1373 = vst [vmem:[%s340 + $0x18] sm:$0xff] %v1307
        %1374 = vst [vmem:[%s340 + $0x20] sm:$0xff] %v1312
        %1375 = vst [vmem:[%s340 + $0x28] sm:$0xff] %v1317
        %1376 = vst [vmem:[%s340 + $0x30] sm:$0xff] %v1322
        %1377 = vst [vmem:[%s340 + $0x38] sm:$0xff] %v1327
        %1378 = vst [vmem:[%s340 + $0x40] sm:$0xff] %v1332
        %1379 = vst [vmem:[%s340 + $0x48] sm:$0xff] %v1337
        %1380 = vst [vmem:[%s340 + $0x50] sm:$0xff] %v1342
        %1381 = vst [vmem:[%s340 + $0x58] sm:$0xff] %v1347
        %1382 = vst [vmem:[%s340 + $0x60] sm:$0xff] %v1352
        %1383 = vst [vmem:[%s340 + $0x68] sm:$0xff] %v1357
        %1384 = vst [vmem:[%s340 + $0x70] sm:$0xff] %v1362
        %1385 = vst [vmem:[%s340 + $0x78] sm:$0xff] %v1367
        %v1386 = vadd.f32 %v1292, %v1297
        %v1387 = vadd.f32 %v1386, %v1302
        %v1388 = vadd.f32 %v1387, %v1307
        %v1389 = vadd.f32 %v1388, %v1312
        %v1390 = vadd.f32 %v1389, %v1317
        %v1391 = vadd.f32 %v1390, %v1322
        %v1392 = vadd.f32 %v1391, %v1327
        %v1393 = vadd.f32 %v1392, %v1332
        %v1394 = vadd.f32 %v1393, %v1337
        %v1395 = vadd.f32 %v1394, %v1342
        %v1396 = vadd.f32 %v1395, %v1347
        %v1397 = vadd.f32 %v1396, %v1352
        %v1398 = vadd.f32 %v1397, %v1357
        %v1399 = vadd.f32 %v1398, %v1362
        %v1400 = vadd.f32 %v1399, %v1367
        %v1401 = vrot.slane %v1400, 4
        %v1402 = vadd.f32 %v1400, %v1401
        %v1403 = vrot.slane %v1402, 2
        %v1404 = vadd.f32 %v1402, %v1403
        %v1405 = vrot.slane %v1404, 1
        %v1406 = vadd.f32 %v1404, %v1405
        %v1407 = vmul.f32 %v1292, %v1292
        %v1408 = vmul.f32 %v1297, %v1297
        %v1409 = vmul.f32 %v1302, %v1302
        %v1410 = vmul.f32 %v1307, %v1307
        %v1411 = vmul.f32 %v1312, %v1312
        %v1412 = vmul.f32 %v1317, %v1317
        %v1413 = vmul.f32 %v1322, %v1322
        %v1414 = vmul.f32 %v1327, %v1327
        %v1415 = vmul.f32 %v1332, %v1332
        %v1416 = vmul.f32 %v1337, %v1337
        %v1417 = vmul.f32 %v1342, %v1342
        %v1418 = vmul.f32 %v1347, %v1347
        %v1419 = vmul.f32 %v1352, %v1352
        %v1420 = vmul.f32 %v1357, %v1357
        %v1421 = vmul.f32 %v1362, %v1362
        %v1422 = vmul.f32 %v1367, %v1367
        %v1423 = vadd.f32 %v1407, %v1408
        %v1424 = vadd.f32 %v1423, %v1409
        %v1425 = vadd.f32 %v1424, %v1410
        %v1426 = vadd.f32 %v1425, %v1411
        %v1427 = vadd.f32 %v1426, %v1412
        %v1428 = vadd.f32 %v1427, %v1413
        %v1429 = vadd.f32 %v1428, %v1414
        %v1430 = vadd.f32 %v1429, %v1415
        %v1431 = vadd.f32 %v1430, %v1416
        %v1432 = vadd.f32 %v1431, %v1417
        %v1433 = vadd.f32 %v1432, %v1418
        %v1434 = vadd.f32 %v1433, %v1419
        %v1435 = vadd.f32 %v1434, %v1420
        %v1436 = vadd.f32 %v1435, %v1421
        %v1437 = vadd.f32 %v1436, %v1422
        %v1438 = vrot.slane %v1437, 4
        %v1439 = vadd.f32 %v1437, %v1438
        %v1440 = vrot.slane %v1439, 2
        %v1441 = vadd.f32 %v1439, %v1440
        %v1442 = vrot.slane %v1441, 1
        %v1443 = vadd.f32 %v1441, %v1442
        %1444 = vst [vmem:[%s347] sm:$0x1] %v1406
        %1445 = vst [vmem:[%s347 + $0x1] sm:$0x1] %v1443
        %s1446 = sand.u32 %s166, 1
        %s1447 = scalar_lea.sflag [#allocation3], %s1446
        %s1448 = sand.u32 %s166, 1
        %s1449 = smul.addr %s1448, 128
        %s1450 = scalar_lea.vmem [#allocation2], %s1449
        %s1451 = sand.u32 %s194, 1
        %s1452 = scalar_lea.sflag [#allocation5], %s1451
        %s1453 = sand.u32 %s194, 1
        %s1454 = smul.addr %s1453, 2
        %s1455 = scalar_lea.vmem [#allocation4], %s1454
        // Predicated region
        $region37: #{tpu_custom_call.1} parent=35 // pred_check
          %p1456 = pneg %p176
        $region38: #{tpu_custom_call.1} parent=35 // pred_check_branch
          %1458 = sbr.rel (%p1456) target = $region40
        $region39: #{tpu_custom_call.1} parent=35 // pred_region
          %s1459 = smul.u32 8, %s28
          %s1461 = ssub.s32 2048, 2048
          %1462 = vsyncadd %s1447, %s1461
          %s1463 = smul.addr %s1459, 2
          %s1464 = smul.addr %s27, 32
          %s1465 = sadd.s32 %s1463, %s1464
          %s1466 = smul.addr %s1465, 128
          %s1467 = scalar_lea.hbm %s4, %s1466
          %s1468 = sshll.u32 %s1450, 4
          %s1469 = int_to_ptr.vmem [resolvable:$true] %s1468
          %1474 = dma.vmem_to_hbm [thread:$0]  %s1469, 2048, %s1467, %s1447, 128, 128, 8
        $region40: #{tpu_custom_call.1} parent=35 // pred_fallthru
          _
        // Predicated region
        $region41: #{tpu_custom_call.1} parent=35 // pred_check
          %p1475 = pneg %p204
        $region42: #{tpu_custom_call.1} parent=35 // pred_check_branch
          %1477 = sbr.rel (%p1475) target = $region44
        $region43: #{tpu_custom_call.1} parent=35 // pred_region
          %s1479 = ssub.s32 32, 32
          %1480 = vsyncadd %s1452, %s1479
          %s1481 = smul.addr %s27, 2
          %s1482 = sadd.s32 %s28, %s1481
          %s1483 = smul.addr %s1482, 32
          %s1484 = scalar_lea.hbm %s5, %s1483
          %s1486 = sshll.u32 %s1455, 4
          %s1487 = int_to_ptr.vmem [resolvable:$true] %s1486
          %1489 = dma.vmem_to_hbm [thread:$0]  %s1487, 32, %s1484, %s1452
        $region44: #{tpu_custom_call.1} parent=35 // pred_fallthru
          _
      $region36: #{tpu_custom_call.1} parent=5 // pred_fallthru
        _
      %p1490 = scmp.le.s32.totalorder 2, %s18
      // Predicated region
      $region45: #{tpu_custom_call.1} parent=5 // pred_check
        %p1491 = pneg %p1490
      $region46: #{tpu_custom_call.1} parent=5 // pred_check_branch
        %1493 = sbr.rel (%p1491) target = $region48
      $region47: #{tpu_custom_call.1} parent=5 // pred_region
        %s1494 = ssub.s32 %s18, 2
        // Predicated region
        $region49: #{tpu_custom_call.1} parent=47 // pred_check
          %p1495 = pneg %p182
        $region50: #{tpu_custom_call.1} parent=47 // pred_check_branch
          %1497 = sbr.rel (%p1495) target = $region52
        $region51: #{tpu_custom_call.1} parent=47 // pred_region
          %s1498 = sand.u32 %s167, 1
          %s1499 = scalar_lea.sflag [#allocation3], %s1498
          %s1500 = sand.u32 %s167, 1
          %s1501 = smul.addr %s1500, 128
          %s1502 = scalar_lea.vmem [#allocation2], %s1501
          %1503 = dma.done %s1499, 2048
        $region52: #{tpu_custom_call.1} parent=47 // pred_fallthru
          _
        // Predicated region
        $region53: #{tpu_custom_call.1} parent=47 // pred_check
          %p1504 = pneg %p210
        $region54: #{tpu_custom_call.1} parent=47 // pred_check_branch
          %1506 = sbr.rel (%p1504) target = $region56
        $region55: #{tpu_custom_call.1} parent=47 // pred_region
          %s1507 = sand.u32 %s195, 1
          %s1508 = scalar_lea.sflag [#allocation5], %s1507
          %s1509 = sand.u32 %s195, 1
          %s1510 = smul.addr %s1509, 2
          %s1511 = scalar_lea.vmem [#allocation4], %s1510
          %1512 = dma.done %s1508, 32
        $region56: #{tpu_custom_call.1} parent=47 // pred_fallthru
          _
      $region48: #{tpu_custom_call.1} parent=5 // pred_fallthru
        _
    $region6: #{tpu_custom_call.1} parent=1 // loop_footer
      %s22 = sadd.s32 1, %s18
    $region7: #{tpu_custom_call.1} parent=1 // loop_footer_branch
      %17 = sbr.rel target = $region3
    $region8: #{tpu_custom_call.1} parent=1 // loop_exit
      _
    %1513 = vsyncpa [#allocation3], 1
    %s1514 = scalar_lea.sflag [#allocation3], 1
    %1515 = vsyncpa %s1514, 1
    %1516 = vsyncpa [#allocation5], 1
    %s1517 = scalar_lea.sflag [#allocation5], 1
    %1518 = vsyncpa %s1517, 1

</llo_original>
